<compile_context>
chip_gen: v5e
topology: v5e:2x2
jax: 0.10.0
libtpu: 0.0.40
codegen_flags: <defaults>
</compile_context>

<pallas_src>
import math
import functools

import jax
import jax.numpy as jnp
from jax import lax
from jax.experimental import pallas as pl
from jax.experimental.pallas import tpu as pltpu

# ---------------- config (small, consistent with the module) ----------------
B = 2
T = 8
N_EMBED = 32
N_HEAD = 4
HEAD_DIM = N_EMBED // N_HEAD
ROPE_BASE = 10000


# ------------------------- Kernel 1: QKV projection + RoPE -------------------------
def _qkv_rope_kernel(x_ref, w_ref, cos_ref, sin_ref, q_ref, k_ref, v_ref, *, hd):
    # x_ref: (T, C) bf16   w_ref: (C, 5*hd) bf16   cos/sin: (T, hd) f32
    x = x_ref[...]
    w = w_ref[...]
    # One MXU matmul gives q, k, v AND the pair-swapped partners (perm folded into W).
    qkv = jnp.dot(x, w, preferred_element_type=jnp.float32)          # (T, 5*hd) f32

    cos = cos_ref[...]                                               # (T, hd)
    sin = sin_ref[...]                                               # (T, hd), signed

    q = qkv[:, 0 * hd:1 * hd] * cos + qkv[:, 3 * hd:4 * hd] * sin    # pre-scaled by 1/sqrt(hd)
    k = qkv[:, 1 * hd:2 * hd] * cos + qkv[:, 4 * hd:5 * hd] * sin
    v = qkv[:, 2 * hd:3 * hd]

    q_ref[...] = q.astype(q_ref.dtype)
    k_ref[...] = k.astype(k_ref.dtype)
    v_ref[...] = v.astype(v_ref.dtype)


# --------- Kernel 2: flash attention (per batch*head, KV-tiled) + out-proj ---------
def _flash_attn_proj_kernel(q_ref, k_ref, v_ref, wproj_ref, o_ref,
                            m_ref, l_ref, acc_ref, *, kv_tile):
    h = pl.program_id(1)
    kv = pl.program_id(2)
    n_kv = pl.num_programs(2)

    # Output accumulator (resident across the head & kv reduction axes) -- zero once per batch.
    @pl.when((h == 0) & (kv == 0))
    def _():
        o_ref[...] = jnp.zeros_like(o_ref)

    # Online-softmax state reset at the start of each (batch, head).
    @pl.when(kv == 0)
    def _():
        m_ref[...] = jnp.full_like(m_ref, -1e30)   # large finite, never -inf
        l_ref[...] = jnp.zeros_like(l_ref)
        acc_ref[...] = jnp.zeros_like(acc_ref)

    q = q_ref[...]                                  # (Tq, hd) bf16 (already scaled)
    k = k_ref[...]                                  # (kv_tile, hd) bf16
    v = v_ref[...]                                  # (kv_tile, hd) bf16

    # Scores for this (batch, head) / KV tile only; head_dim is the contraction dim.
    s = lax.dot_general(q, k, (((1,), (1,)), ((), ())),
                        preferred_element_type=jnp.float32)          # (Tq, kv_tile) f32

    # Causal mask generated in-kernel (iota + compare) -- no precomputed bias tensor.
    tq = q.shape[0]
    row = lax.broadcasted_iota(jnp.int32, (tq, kv_tile), 0)          # absolute query index
    col = lax.broadcasted_iota(jnp.int32, (tq, kv_tile), 1) + kv * kv_tile
    s = jnp.where(row >= col, s, -1e30)

    m_prev = m_ref[...]
    m_new = jnp.maximum(m_prev, jnp.max(s, axis=-1, keepdims=True))
    alpha = jnp.exp(m_prev - m_new)
    p = jnp.exp(s - m_new)                                           # f32
    l_ref[...] = alpha * l_ref[...] + jnp.sum(p, axis=-1, keepdims=True)
    acc_ref[...] = alpha * acc_ref[...] + jnp.dot(
        p.astype(v.dtype), v, preferred_element_type=jnp.float32)
    m_ref[...] = m_new

    # Finalize this head: exact divide, then fold the per-head output projection and
    # accumulate into the (T, C) output (head merge happens via the accumulation).
    @pl.when(kv == n_kv - 1)
    def _():
        y_h = (acc_ref[...] / l_ref[...]).astype(wproj_ref.dtype)    # (Tq, hd) bf16
        o_ref[...] += jnp.dot(y_h, wproj_ref[...],
                              preferred_element_type=jnp.float32).astype(o_ref.dtype)


# ---------------------------------- wrapper ----------------------------------
def causal_self_attention(x, w_qkv, w_proj, *, n_head, rope_base):
    """x: (B, T, C) f32; w_qkv: (C, 3C); w_proj: (C, C) (y = x @ W layout)."""
    Bx, Tx, C = x.shape
    hd = C // n_head
    scale = 1.0 / math.sqrt(hd)

    # --- RoPE tables (position_ids=None -> arange(T)), interleaved-pair convention ---
    pos = jnp.arange(Tx, dtype=jnp.float32)
    inv_freq = 1.0 / (rope_base ** (jnp.arange(0, hd, 2, dtype=jnp.float32) / hd))
    ang = pos[:, None] * inv_freq[None, :]                           # (T, hd/2)
    cos_hd = jnp.repeat(jnp.cos(ang), 2, axis=-1).astype(jnp.float32)            # [c0,c0,c1,c1,...]
    sin_hd = jnp.stack([-jnp.sin(ang), jnp.sin(ang)], axis=-1).reshape(Tx, hd)   # [-s0,s0,-s1,s1,...]
    sin_hd = sin_hd.astype(jnp.float32)

    # --- per-head fused weight (H, C, 5*hd): pair-swap + 1/sqrt(hd) folded in ---
    swap = jnp.arange(hd) ^ 1                                        # partner column within a head
    wq = (w_qkv[:, :C] * scale).reshape(C, n_head, hd)
    wk = w_qkv[:, C:2 * C].reshape(C, n_head, hd)
    wv = w_qkv[:, 2 * C:].reshape(C, n_head, hd)
    w_head = jnp.concatenate([wq, wk, wv, wq[..., swap], wk[..., swap]], axis=-1)  # (C, H, 5hd)
    w_head = jnp.transpose(w_head, (1, 0, 2)).astype(jnp.bfloat16)   # (H, C, 5hd)

    wproj_h = w_proj.reshape(n_head, hd, C).astype(jnp.bfloat16)     # per-head out-proj rows
    x_bf = x.astype(jnp.bfloat16)

    # ---------------- kernel 1: per-(batch, head) QKV + RoPE ----------------
    qkv_out_shape = tuple(jax.ShapeDtypeStruct((Bx, n_head, Tx, hd), jnp.bfloat16)
                          for _ in range(3))
    q_h, k_h, v_h = pl.pallas_call(
        functools.partial(_qkv_rope_kernel, hd=hd),
        out_shape=qkv_out_shape,
        grid=(Bx, n_head),
        in_specs=[
            pl.BlockSpec((None, Tx, C), lambda b, h: (b, 0, 0)),          # x (bf16)
            pl.BlockSpec((None, C, 5 * hd), lambda b, h: (h, 0, 0)),      # per-head fused W (bf16)
            pl.BlockSpec((Tx, hd), lambda b, h: (0, 0)),                  # cos (f32)
            pl.BlockSpec((Tx, hd), lambda b, h: (0, 0)),                  # signed sin (f32)
        ],
        out_specs=[pl.BlockSpec((None, None, Tx, hd), lambda b, h: (b, h, 0, 0))] * 3,
        compiler_params=pltpu.CompilerParams(
            dimension_semantics=("parallel", "parallel")),
    )(x_bf, w_head, cos_hd, sin_hd)

    # ------------- kernel 2: flash attention + folded output projection -------------
    # KV tile: whole sequence at this toy T; capped at 256 rows for production sequences
    # (use ~2x smaller on v7x's 64 MiB VMEM if the live set gets tight).
    kv_tile = Tx if Tx <= 256 else 256
    assert Tx % kv_tile == 0
    n_kv = Tx // kv_tile

    out = pl.pallas_call(
        functools.partial(_flash_attn_proj_kernel, kv_tile=kv_tile),
        out_shape=jax.ShapeDtypeStruct((Bx, Tx, C), x.dtype),
        grid=(Bx, n_head, n_kv),
        in_specs=[
            pl.BlockSpec((None, None, Tx, hd), lambda b, h, kv: (b, h, 0, 0)),        # q
            pl.BlockSpec((None, None, kv_tile, hd), lambda b, h, kv: (b, h, kv, 0)),  # k tile
            pl.BlockSpec((None, None, kv_tile, hd), lambda b, h, kv: (b, h, kv, 0)),  # v tile
            pl.BlockSpec((None, hd, C), lambda b, h, kv: (h, 0, 0)),                  # Wproj rows
        ],
        out_specs=pl.BlockSpec((None, Tx, C), lambda b, h, kv: (b, 0, 0)),
        scratch_shapes=[
            pltpu.VMEM((Tx, 1), jnp.float32),    # running max
            pltpu.VMEM((Tx, 1), jnp.float32),    # running denom
            pltpu.VMEM((Tx, hd), jnp.float32),   # running PV accumulator
        ],
        compiler_params=pltpu.CompilerParams(
            dimension_semantics=("parallel", "arbitrary", "arbitrary"),
            vmem_limit_bytes=32 * 1024 * 1024),
    )(q_h, k_h, v_h, wproj_h)
    return out


# ------------------------- pure-JAX reference check --------------------------
def reference(x, w_qkv, w_proj, *, n_head, rope_base):
    Bx, Tx, C = x.shape
    hd = C // n_head
    qkv = x @ w_qkv
    q, k, v = jnp.split(qkv, 3, axis=-1)
    q = q.reshape(Bx, Tx, n_head, hd)
    k = k.reshape(Bx, Tx, n_head, hd)
    v = v.reshape(Bx, Tx, n_head, hd)

    pos = jnp.arange(Tx, dtype=jnp.float32)
    inv_freq = 1.0 / (rope_base ** (jnp.arange(0, hd, 2, dtype=jnp.float32) / hd))
    ang = pos[:, None] * inv_freq[None, :]
    cos = jnp.cos(ang)[None, :, None, :]
    sin = jnp.sin(ang)[None, :, None, :]

    def rope(t):
        tp = t.reshape(Bx, Tx, n_head, hd // 2, 2)
        o0 = tp[..., 0] * cos - tp[..., 1] * sin
        o1 = tp[..., 1] * cos + tp[..., 0] * sin
        return jnp.stack([o0, o1], axis=-1).reshape(Bx, Tx, n_head, hd)

    q, k = rope(q), rope(k)
    q = q.transpose(0, 2, 1, 3)
    k = k.transpose(0, 2, 1, 3)
    v = v.transpose(0, 2, 1, 3)
    s = jnp.einsum("bhqd,bhkd->bhqk", q, k) / jnp.sqrt(jnp.float32(hd))
    mask = jnp.tril(jnp.ones((Tx, Tx), dtype=bool))
    s = jnp.where(mask[None, None], s, -jnp.inf)
    p = jax.nn.softmax(s, axis=-1)
    y = jnp.einsum("bhqk,bhkd->bhqd", p, v)
    y = y.transpose(0, 2, 1, 3).reshape(Bx, Tx, C)
    return y @ w_proj


# ----------------------------------- main -------------------------------------
if __name__ == "__main__":
    key = jax.random.PRNGKey(0)
    kx, kw1, kw2 = jax.random.split(key, 3)

    x = jax.random.normal(kx, (B, T, N_EMBED), dtype=jnp.float32)
    # Weights stored as [in_features, out_features] so y = x @ W (matches nn.Linear math
    # with bias=False after transposing torch's [out, in] storage).
    w_qkv = jax.random.normal(kw1, (N_EMBED, 3 * N_EMBED), dtype=jnp.float32) * 0.02
    w_proj = jax.random.normal(kw2, (N_EMBED, N_EMBED), dtype=jnp.float32) * 0.02

    out = causal_self_attention(x, w_qkv, w_proj, n_head=N_HEAD, rope_base=ROPE_BASE)
    out = jax.block_until_ready(out)

    ref = reference(x, w_qkv, w_proj, n_head=N_HEAD, rope_base=ROPE_BASE)
    assert out.shape == (B, T, N_EMBED)
    # Tolerance accounts for bf16 operands (f32 accumulate, f32 softmax, exact divide).
    max_diff = jnp.max(jnp.abs(out - ref))
    assert jnp.allclose(out, ref, rtol=5e-2, atol=2e-3), \
        f"mismatch vs reference (max |diff| = {max_diff})"

    print("KERNEL_OK")
</pallas_src>

<mosaic_0001>
module attributes {stable_mosaic.version = 11 : i64} {
  func.func @_qkv_rope_kernel(%arg0: i32, %arg1: i32, %arg2: memref<1x8x32xbf16, #tpu.memory_space<vmem>>, %arg3: memref<1x32x40xbf16, #tpu.memory_space<vmem>>, %arg4: memref<8x8xf32, #tpu.memory_space<vmem>>, %arg5: memref<8x8xf32, #tpu.memory_space<vmem>>, %arg6: memref<1x1x8x8xbf16, #tpu.memory_space<vmem>>, %arg7: memref<1x1x8x8xbf16, #tpu.memory_space<vmem>>, %arg8: memref<1x1x8x8xbf16, #tpu.memory_space<vmem>>) attributes {dimension_semantics = [#tpu.dimension_semantics<parallel>, #tpu.dimension_semantics<parallel>], iteration_bounds = array<i64: 2, 4>, scalar_prefetch = 0 : i64, scratch_operands = 0 : i64, tpu.core_type = #tpu.core_type<tc>, window_params = [{transform_indices = @transform_0, window_bounds = array<i64: 1, 8, 32>}, {transform_indices = @transform_1, window_bounds = array<i64: 1, 32, 40>}, {pipeline_mode = #tpu.pipeline_mode<synchronous>, transform_indices = @transform_2, window_bounds = array<i64: 8, 8>}, {pipeline_mode = #tpu.pipeline_mode<synchronous>, transform_indices = @transform_3, window_bounds = array<i64: 8, 8>}, {transform_indices = @transform_4, window_bounds = array<i64: 1, 1, 8, 8>}, {transform_indices = @transform_5, window_bounds = array<i64: 1, 1, 8, 8>}, {transform_indices = @transform_6, window_bounds = array<i64: 1, 1, 8, 8>}]} {
    %c0 = arith.constant 0 : index
    %c0_0 = arith.constant 0 : index
    %c0_1 = arith.constant 0 : index
    %0 = vector.load %arg2[%c0, %c0_0, %c0_1] : memref<1x8x32xbf16, #tpu.memory_space<vmem>>, vector<1x8x32xbf16>
    %1 = vector.shape_cast %0 : vector<1x8x32xbf16> to vector<8x32xbf16>
    %c0_2 = arith.constant 0 : index
    %c0_3 = arith.constant 0 : index
    %c0_4 = arith.constant 0 : index
    %2 = vector.load %arg3[%c0_2, %c0_3, %c0_4] : memref<1x32x40xbf16, #tpu.memory_space<vmem>>, vector<1x32x40xbf16>
    %3 = vector.shape_cast %2 : vector<1x32x40xbf16> to vector<32x40xbf16>
    %cst = arith.constant dense<0.000000e+00> : vector<8x40xf32>
    %4 = tpu.matmul %1, %3, %cst {dimension_numbers = #tpu.dot_dimension_numbers<[1], [0], [0], [1], [0, 0, 1, 1], [], []>} : vector<8x32xbf16>, vector<32x40xbf16>, vector<8x40xf32> -> vector<8x40xf32>
    %c0_5 = arith.constant 0 : index
    %c0_6 = arith.constant 0 : index
    %5 = vector.load %arg4[%c0_5, %c0_6] : memref<8x8xf32, #tpu.memory_space<vmem>>, vector<8x8xf32>
    %c0_7 = arith.constant 0 : index
    %c0_8 = arith.constant 0 : index
    %6 = vector.load %arg5[%c0_7, %c0_8] : memref<8x8xf32, #tpu.memory_space<vmem>>, vector<8x8xf32>
    %7 = vector.extract_strided_slice %4 {offsets = [0, 0], sizes = [8, 8], strides = [1, 1]} : vector<8x40xf32> to vector<8x8xf32>
    %8 = arith.mulf %7, %5 : vector<8x8xf32>
    %9 = vector.extract_strided_slice %4 {offsets = [0, 24], sizes = [8, 8], strides = [1, 1]} : vector<8x40xf32> to vector<8x8xf32>
    %10 = arith.mulf %9, %6 : vector<8x8xf32>
    %11 = arith.addf %8, %10 : vector<8x8xf32>
    %12 = vector.extract_strided_slice %4 {offsets = [0, 8], sizes = [8, 8], strides = [1, 1]} : vector<8x40xf32> to vector<8x8xf32>
    %13 = arith.mulf %12, %5 : vector<8x8xf32>
    %14 = vector.extract_strided_slice %4 {offsets = [0, 32], sizes = [8, 8], strides = [1, 1]} : vector<8x40xf32> to vector<8x8xf32>
    %15 = arith.mulf %14, %6 : vector<8x8xf32>
    %16 = arith.addf %13, %15 : vector<8x8xf32>
    %17 = vector.extract_strided_slice %4 {offsets = [0, 16], sizes = [8, 8], strides = [1, 1]} : vector<8x40xf32> to vector<8x8xf32>
    %18 = arith.truncf %11 : vector<8x8xf32> to vector<8x8xbf16>
    %c0_9 = arith.constant 0 : index
    %c0_10 = arith.constant 0 : index
    %c0_11 = arith.constant 0 : index
    %c0_12 = arith.constant 0 : index
    %19 = vector.load %arg6[%c0_9, %c0_10, %c0_11, %c0_12] : memref<1x1x8x8xbf16, #tpu.memory_space<vmem>>, vector<1x1x8x8xbf16>
    %20 = vector.shape_cast %19 : vector<1x1x8x8xbf16> to vector<8x8xbf16>
    %21 = vector.shape_cast %18 : vector<8x8xbf16> to vector<1x1x8x8xbf16>
    tpu.vector_store %arg6[%c0_9, %c0_10, %c0_11, %c0_12], %21 {strides = array<i32>} : memref<1x1x8x8xbf16, #tpu.memory_space<vmem>>, vector<1x1x8x8xbf16>,
    %22 = arith.truncf %16 : vector<8x8xf32> to vector<8x8xbf16>
    %c0_13 = arith.constant 0 : index
    %c0_14 = arith.constant 0 : index
    %c0_15 = arith.constant 0 : index
    %c0_16 = arith.constant 0 : index
    %23 = vector.load %arg7[%c0_13, %c0_14, %c0_15, %c0_16] : memref<1x1x8x8xbf16, #tpu.memory_space<vmem>>, vector<1x1x8x8xbf16>
    %24 = vector.shape_cast %23 : vector<1x1x8x8xbf16> to vector<8x8xbf16>
    %25 = vector.shape_cast %22 : vector<8x8xbf16> to vector<1x1x8x8xbf16>
    tpu.vector_store %arg7[%c0_13, %c0_14, %c0_15, %c0_16], %25 {strides = array<i32>} : memref<1x1x8x8xbf16, #tpu.memory_space<vmem>>, vector<1x1x8x8xbf16>,
    %26 = arith.truncf %17 : vector<8x8xf32> to vector<8x8xbf16>
    %c0_17 = arith.constant 0 : index
    %c0_18 = arith.constant 0 : index
    %c0_19 = arith.constant 0 : index
    %c0_20 = arith.constant 0 : index
    %27 = vector.load %arg8[%c0_17, %c0_18, %c0_19, %c0_20] : memref<1x1x8x8xbf16, #tpu.memory_space<vmem>>, vector<1x1x8x8xbf16>
    %28 = vector.shape_cast %27 : vector<1x1x8x8xbf16> to vector<8x8xbf16>
    %29 = vector.shape_cast %26 : vector<8x8xbf16> to vector<1x1x8x8xbf16>
    tpu.vector_store %arg8[%c0_17, %c0_18, %c0_19, %c0_20], %29 {strides = array<i32>} : memref<1x1x8x8xbf16, #tpu.memory_space<vmem>>, vector<1x1x8x8xbf16>,
    return
  }
  func.func @transform_0(%arg0: i32, %arg1: i32) -> (i32, i32, i32) {
    %c0_i32 = arith.constant 0 : i32
    %c0_i32_0 = arith.constant 0 : i32
    %c0_i32_1 = arith.constant 0 : i32
    return %arg0, %c0_i32, %c0_i32_0 : i32, i32, i32
  }
  func.func @transform_1(%arg0: i32, %arg1: i32) -> (i32, i32, i32) {
    %c0_i32 = arith.constant 0 : i32
    %c0_i32_0 = arith.constant 0 : i32
    %c0_i32_1 = arith.constant 0 : i32
    return %arg1, %c0_i32, %c0_i32_0 : i32, i32, i32
  }
  func.func @transform_2(%arg0: i32, %arg1: i32) -> (i32, i32) {
    %c0_i32 = arith.constant 0 : i32
    %c0_i32_0 = arith.constant 0 : i32
    %c0_i32_1 = arith.constant 0 : i32
    return %c0_i32, %c0_i32_0 : i32, i32
  }
  func.func @transform_3(%arg0: i32, %arg1: i32) -> (i32, i32) {
    %c0_i32 = arith.constant 0 : i32
    %c0_i32_0 = arith.constant 0 : i32
    %c0_i32_1 = arith.constant 0 : i32
    return %c0_i32, %c0_i32_0 : i32, i32
  }
  func.func @transform_4(%arg0: i32, %arg1: i32) -> (i32, i32, i32, i32) {
    %c0_i32 = arith.constant 0 : i32
    %c0_i32_0 = arith.constant 0 : i32
    %c0_i32_1 = arith.constant 0 : i32
    return %arg0, %arg1, %c0_i32, %c0_i32_0 : i32, i32, i32, i32
  }
  func.func @transform_5(%arg0: i32, %arg1: i32) -> (i32, i32, i32, i32) {
    %c0_i32 = arith.constant 0 : i32
    %c0_i32_0 = arith.constant 0 : i32
    %c0_i32_1 = arith.constant 0 : i32
    return %arg0, %arg1, %c0_i32, %c0_i32_0 : i32, i32, i32, i32
  }
  func.func @transform_6(%arg0: i32, %arg1: i32) -> (i32, i32, i32, i32) {
    %c0_i32 = arith.constant 0 : i32
    %c0_i32_0 = arith.constant 0 : i32
    %c0_i32_1 = arith.constant 0 : i32
    return %arg0, %arg1, %c0_i32, %c0_i32_0 : i32, i32, i32, i32
  }
}

</mosaic_0001>

<llo_original>
// kernel: tpu_custom_call.1
$region0: #{tpu_custom_call.1}
  #allocation0 [shape = 'u32[]', space=smem, size = 0x4, offset = 0x4, fixed_abs, tag = 'smem constant byte address 0x4 - core index']
  #allocation1 [shape = 'u32[72,128]{1,0:T(1,128)}', space=vmem, size = 0x9000, scoped, tag = 'internal scratch']
  %s0 = inlined_call_operand.hbm [shape: bf16[2,8,32], index: 0, kind: input, shape index: {}]
  %s1 = inlined_call_operand.hbm [shape: bf16[4,32,40], index: 1, kind: input, shape index: {}]
  %s2 = inlined_call_operand.hbm [shape: f32[8,8], index: 2, kind: input, shape index: {}]
  %s3 = inlined_call_operand.hbm [shape: f32[8,8], index: 3, kind: input, shape index: {}]
  %s4 = inlined_call_operand.hbm [shape: bf16[2,4,8,8], index: 4, kind: output, shape index: {0}]
  %s5 = inlined_call_operand.hbm [shape: bf16[2,4,8,8], index: 5, kind: output, shape index: {1}]
  %s6 = inlined_call_operand.hbm [shape: bf16[2,4,8,8], index: 6, kind: output, shape index: {2}]
  %7 = xla_tuple %s4, %s5, %s6
  %s8 = sld [smem:[#allocation0]]
  $region81: #{tpu_custom_call.1} parent=0
    _
  %s10 = ssub.s32 1, %s8
  %s11 = scalar_select 0, %s10, %s8
  $region1: #{tpu_custom_call.1} parent=0
    #allocation2 [shape = 'u8[4096]{0}', space=vmem, size = 0x1000, scoped, tag = 'input window, operand 0']
    #allocation3 [shape = 's32[2]{0}', space=sflag, size = 0x8, scoped, tag = 'scoped memory for tpu_custom_call.1']
    #allocation4 [shape = 's32[2]{0}', space=sflag, size = 0x8, scoped, tag = 'scoped memory for tpu_custom_call.1']
    #allocation5 [shape = 'u8[16384]{0}', space=vmem, size = 0x4000, scoped, tag = 'input window, operand 1']
    #allocation6 [shape = 's32[2]{0}', space=sflag, size = 0x8, scoped, tag = 'scoped memory for tpu_custom_call.1']
    #allocation7 [shape = 'u8[4096]{0}', space=vmem, size = 0x1000, scoped, tag = 'input window, operand 2, single buffered']
    #allocation8 [shape = 'u8[4096]{0}', space=vmem, size = 0x1000, scoped, tag = 'input window, operand 3, single buffered']
    #allocation9 [shape = 's32[1]{0}', space=sflag, size = 0x4, scoped, tag = 'scoped memory for tpu_custom_call.1']
    #allocation10 [shape = 'u8[4096]{0}', space=vmem, size = 0x1000, scoped, tag = 'output window, operand 0']
    #allocation11 [shape = 'u8[4096]{0}', space=vmem, size = 0x1000, scoped, tag = 'output window, operand 1']
    #allocation12 [shape = 's32[2]{0}', space=sflag, size = 0x8, scoped, tag = 'scoped memory for tpu_custom_call.1']
    #allocation13 [shape = 'u8[4096]{0}', space=vmem, size = 0x1000, scoped, tag = 'output window, operand 2']
    %12 = vsyncpa [#allocation3], 0
    %s13 = scalar_lea.sflag [#allocation3], 1
    %14 = vsyncpa %s13, 0
    %15 = vsyncpa [#allocation6], 0
    %s16 = scalar_lea.sflag [#allocation6], 1
    %17 = vsyncpa %s16, 0
    %18 = vsyncpa [#allocation9], 0
    %19 = vsyncpa [#allocation4], 0
    %s20 = scalar_lea.sflag [#allocation4], 1
    %21 = vsyncpa %s20, 0
    %22 = vsyncpa [#allocation12], 0
    %s23 = scalar_lea.sflag [#allocation12], 1
    %24 = vsyncpa %s23, 0
    loop: start=0, step=1, limit=10
    $region2: #{tpu_custom_call.1} parent=1 // loop_pre_header
      _
    $region3: #{tpu_custom_call.1} parent=1 // loop_header
      %s26 = sphi 0, %s30
      %p27 = scmp.ge.s32.totalorder %s26, 10
      %s33 = sphi 0, %s45
      %s34 = sphi 0, %s41
      %s35 = sphi 0, %s33
      %s36 = sphi 0, %s34
      %s37 = sphi 0, %s35
      %s38 = sphi 0, %s36
      %s48 = sphi 0, %s50
      %s51 = sphi 0, %s48
      %s52 = sphi 0, %s51
      %s68 = sphi 0, %s52
      %s74 = sphi 0, %s76
      %s77 = sphi 0, %s74
      %s78 = sphi 0, %s77
      %s94 = sphi 0, %s78
      %s98 = sphi 0, %s98
      %s100 = sphi 0, %s98
      %s101 = sphi 0, %s100
      %s115 = sphi 0, %s101
      %s119 = sphi 0, %s119
      %s121 = sphi 0, %s119
      %s122 = sphi 0, %s121
      %s136 = sphi 0, %s122
      %s144 = sphi 0, %s146
      %s147 = sphi 0, %s144
      %s148 = sphi 0, %s147
      %s164 = sphi 0, %s148
      %s172 = sphi 0, %s174
      %s175 = sphi 0, %s172
      %s176 = sphi 0, %s175
      %s192 = sphi 0, %s176
      %s200 = sphi 0, %s202
      %s203 = sphi 0, %s200
      %s204 = sphi 0, %s203
      %s220 = sphi 0, %s204
    $region4: #{tpu_custom_call.1} parent=1 // loop_header_branch
      %29 = sbr.rel (%p27) target = $region8
    $region5: #{tpu_custom_call.1} parent=1 // loop_body
      %s31 = ssub.s32 %s26, 1
      %s32 = ssub.s32 %s26, 2
      %s39 = sadd.s32 1, %s34
      %p40 = scmp.ge.s32.totalorder %s39, 4
      %s41 = scalar_select %p40, 0, %s39
      %s42 = sadd.s32 1, %s33
      %s43 = scalar_select %p40, %s42, %s33
      %p44 = scmp.ge.s32.totalorder %s43, 2
      %s45 = scalar_select %p44, 0, %s43
      %s46 = ssub.s32 %s33, %s45
      %p47 = scmp.eq.s32.totalorder %s46, 0
      %s49 = sadd.s32 %s48, 1
      %s50 = scalar_select %p47, %s48, %s49
      %p53 = pneg %p47
      %p54 = scmp.eq.s32.totalorder %s26, 7
      %p55 = por %p53, %p54
      %p56 = scmp.ne.s32.totalorder %s48, %s51
      %p57 = scmp.eq.s32.totalorder %s26, 0
      %p58 = por %p56, %p57
      %p59 = scmp.ne.s32.totalorder %s48, %s51
      %p60 = scmp.eq.s32.totalorder %s31, 7
      %p61 = por %p59, %p60
      %p62 = scmp.ne.s32.totalorder %s51, %s52
      %p63 = scmp.eq.s32.totalorder %s31, 0
      %p64 = por %p62, %p63
      %p65 = scmp.ne.s32.totalorder %s51, %s52
      %p66 = scmp.eq.s32.totalorder %s32, 7
      %p67 = por %p65, %p66
      %p69 = scmp.ne.s32.totalorder %s52, %s68
      %p70 = scmp.eq.s32.totalorder %s32, 0
      %p71 = por %p69, %p70
      %s72 = ssub.s32 %s34, %s41
      %p73 = scmp.eq.s32.totalorder %s72, 0
      %s75 = sadd.s32 %s74, 1
      %s76 = scalar_select %p73, %s74, %s75
      %p79 = pneg %p73
      %p80 = scmp.eq.s32.totalorder %s26, 7
      %p81 = por %p79, %p80
      %p82 = scmp.ne.s32.totalorder %s74, %s77
      %p83 = scmp.eq.s32.totalorder %s26, 0
      %p84 = por %p82, %p83
      %p85 = scmp.ne.s32.totalorder %s74, %s77
      %p86 = scmp.eq.s32.totalorder %s31, 7
      %p87 = por %p85, %p86
      %p88 = scmp.ne.s32.totalorder %s77, %s78
      %p89 = scmp.eq.s32.totalorder %s31, 0
      %p90 = por %p88, %p89
      %p91 = scmp.ne.s32.totalorder %s77, %s78
      %p92 = scmp.eq.s32.totalorder %s32, 7
      %p93 = por %p91, %p92
      %p95 = scmp.ne.s32.totalorder %s78, %s94
      %p96 = scmp.eq.s32.totalorder %s32, 0
      %p97 = por %p95, %p96
      %s99 = sadd.s32 %s98, 1
      %p102 = scmp.eq.s32.totalorder %s26, 7
      %p103 = scmp.ne.s32.totalorder %s98, %s100
      %p104 = scmp.eq.s32.totalorder %s26, 0
      %p105 = por %p103, %p104
      %p106 = scmp.ne.s32.totalorder %s98, %s100
      %p107 = scmp.eq.s32.totalorder %s31, 7
      %p108 = por %p106, %p107
      %p109 = scmp.ne.s32.totalorder %s100, %s101
      %p110 = scmp.eq.s32.totalorder %s31, 0
      %p111 = por %p109, %p110
      %p112 = scmp.ne.s32.totalorder %s100, %s101
      %p113 = scmp.eq.s32.totalorder %s32, 7
      %p114 = por %p112, %p113
      %p116 = scmp.ne.s32.totalorder %s101, %s115
      %p117 = scmp.eq.s32.totalorder %s32, 0
      %p118 = por %p116, %p117
      %s120 = sadd.s32 %s119, 1
      %p123 = scmp.eq.s32.totalorder %s26, 7
      %p124 = scmp.ne.s32.totalorder %s119, %s121
      %p125 = scmp.eq.s32.totalorder %s26, 0
      %p126 = por %p124, %p125
      %p127 = scmp.ne.s32.totalorder %s119, %s121
      %p128 = scmp.eq.s32.totalorder %s31, 7
      %p129 = por %p127, %p128
      %p130 = scmp.ne.s32.totalorder %s121, %s122
      %p131 = scmp.eq.s32.totalorder %s31, 0
      %p132 = por %p130, %p131
      %p133 = scmp.ne.s32.totalorder %s121, %s122
      %p134 = scmp.eq.s32.totalorder %s32, 7
      %p135 = por %p133, %p134
      %p137 = scmp.ne.s32.totalorder %s122, %s136
      %p138 = scmp.eq.s32.totalorder %s32, 0
      %p139 = por %p137, %p138
      %s140 = ssub.s32 %s33, %s45
      %s141 = ssub.s32 %s34, %s41
      %s142 = sor.u32 %s140, %s141
      %p143 = scmp.eq.s32.totalorder %s142, 0
      %s145 = sadd.s32 %s144, 1
      %s146 = scalar_select %p143, %s144, %s145
      %p149 = pneg %p143
      %p150 = scmp.eq.s32.totalorder %s26, 7
      %p151 = por %p149, %p150
      %p152 = scmp.ne.s32.totalorder %s144, %s147
      %p153 = scmp.eq.s32.totalorder %s26, 0
      %p154 = por %p152, %p153
      %p155 = scmp.ne.s32.totalorder %s144, %s147
      %p156 = scmp.eq.s32.totalorder %s31, 7
      %p157 = por %p155, %p156
      %p158 = scmp.ne.s32.totalorder %s147, %s148
      %p159 = scmp.eq.s32.totalorder %s31, 0
      %p160 = por %p158, %p159
      %p161 = scmp.ne.s32.totalorder %s147, %s148
      %p162 = scmp.eq.s32.totalorder %s32, 7
      %p163 = por %p161, %p162
      %p165 = scmp.ne.s32.totalorder %s148, %s164
      %p166 = scmp.eq.s32.totalorder %s32, 0
      %p167 = por %p165, %p166
      %s168 = ssub.s32 %s33, %s45
      %s169 = ssub.s32 %s34, %s41
      %s170 = sor.u32 %s168, %s169
      %p171 = scmp.eq.s32.totalorder %s170, 0
      %s173 = sadd.s32 %s172, 1
      %s174 = scalar_select %p171, %s172, %s173
      %p177 = pneg %p171
      %p178 = scmp.eq.s32.totalorder %s26, 7
      %p179 = por %p177, %p178
      %p180 = scmp.ne.s32.totalorder %s172, %s175
      %p181 = scmp.eq.s32.totalorder %s26, 0
      %p182 = por %p180, %p181
      %p183 = scmp.ne.s32.totalorder %s172, %s175
      %p184 = scmp.eq.s32.totalorder %s31, 7
      %p185 = por %p183, %p184
      %p186 = scmp.ne.s32.totalorder %s175, %s176
      %p187 = scmp.eq.s32.totalorder %s31, 0
      %p188 = por %p186, %p187
      %p189 = scmp.ne.s32.totalorder %s175, %s176
      %p190 = scmp.eq.s32.totalorder %s32, 7
      %p191 = por %p189, %p190
      %p193 = scmp.ne.s32.totalorder %s176, %s192
      %p194 = scmp.eq.s32.totalorder %s32, 0
      %p195 = por %p193, %p194
      %s196 = ssub.s32 %s33, %s45
      %s197 = ssub.s32 %s34, %s41
      %s198 = sor.u32 %s196, %s197
      %p199 = scmp.eq.s32.totalorder %s198, 0
      %s201 = sadd.s32 %s200, 1
      %s202 = scalar_select %p199, %s200, %s201
      %p205 = pneg %p199
      %p206 = scmp.eq.s32.totalorder %s26, 7
      %p207 = por %p205, %p206
      %p208 = scmp.ne.s32.totalorder %s200, %s203
      %p209 = scmp.eq.s32.totalorder %s26, 0
      %p210 = por %p208, %p209
      %p211 = scmp.ne.s32.totalorder %s200, %s203
      %p212 = scmp.eq.s32.totalorder %s31, 7
      %p213 = por %p211, %p212
      %p214 = scmp.ne.s32.totalorder %s203, %s204
      %p215 = scmp.eq.s32.totalorder %s31, 0
      %p216 = por %p214, %p215
      %p217 = scmp.ne.s32.totalorder %s203, %s204
      %p218 = scmp.eq.s32.totalorder %s32, 7
      %p219 = por %p217, %p218
      %p221 = scmp.ne.s32.totalorder %s204, %s220
      %p222 = scmp.eq.s32.totalorder %s32, 0
      %p223 = por %p221, %p222
      %p224 = scmp.le.s32.totalorder 1, %s26
      %p225 = scmp.lt.s32.totalorder %s26, 9
      %p226 = pnand %p224, %p225
      %p227 = pneg %p226
      // Predicated region
      $region9: #{tpu_custom_call.1} parent=5 // pred_check
        _
      $region10: #{tpu_custom_call.1} parent=5 // pred_check_branch
        %229 = sbr.rel (%p226) target = $region12
      $region11: #{tpu_custom_call.1} parent=5 // pred_region
        %s230 = ssub.s32 %s26, 1
        // Predicated region
        $region13: #{tpu_custom_call.1} parent=11 // pred_check
          %p231 = pneg %p111
        $region14: #{tpu_custom_call.1} parent=11 // pred_check_branch
          %233 = sbr.rel (%p231) target = $region16
        $region15: #{tpu_custom_call.1} parent=11 // pred_region
          %235 = vsyncadd [#allocation6], 0
          %s237 = sshll.u32 %s2, 4
          %s238 = int_to_ptr.hbm [resolvable:$true] %s237
          %s239 = sshll.u32 [#allocation7], 4
          %s240 = int_to_ptr.vmem [resolvable:$true] %s239
          %242 = dma.hbm_to_vmem [thread:$0]  %s238, 128, %s240, [#allocation6]
        $region16: #{tpu_custom_call.1} parent=11 // pred_fallthru
          _
        // Predicated region
        $region17: #{tpu_custom_call.1} parent=11 // pred_check
          %p243 = pneg %p132
        $region18: #{tpu_custom_call.1} parent=11 // pred_check_branch
          %245 = sbr.rel (%p243) target = $region20
        $region19: #{tpu_custom_call.1} parent=11 // pred_region
          %247 = vsyncadd [#allocation9], 0
          %s249 = sshll.u32 %s3, 4
          %s250 = int_to_ptr.hbm [resolvable:$true] %s249
          %s251 = sshll.u32 [#allocation8], 4
          %s252 = int_to_ptr.vmem [resolvable:$true] %s251
          %254 = dma.hbm_to_vmem [thread:$0]  %s250, 128, %s252, [#allocation9]
        $region20: #{tpu_custom_call.1} parent=11 // pred_fallthru
          _
      $region12: #{tpu_custom_call.1} parent=5 // pred_fallthru
        _
      %p255 = scmp.lt.s32.totalorder %s26, 8
      // Predicated region
      $region21: #{tpu_custom_call.1} parent=5 // pred_check
        %p256 = pneg %p255
      $region22: #{tpu_custom_call.1} parent=5 // pred_check_branch
        %258 = sbr.rel (%p256) target = $region24
      $region23: #{tpu_custom_call.1} parent=5 // pred_region
        // Predicated region
        $region25: #{tpu_custom_call.1} parent=23 // pred_check
          %p259 = pneg %p58
        $region26: #{tpu_custom_call.1} parent=23 // pred_check_branch
          %261 = sbr.rel (%p259) target = $region28
        $region27: #{tpu_custom_call.1} parent=23 // pred_region
          %s262 = sand.u32 %s48, 1
          %s263 = scalar_lea.sflag [#allocation3], %s262
          %s264 = sand.u32 %s48, 1
          %s265 = smul.addr %s264, 4
          %s266 = scalar_lea.vmem [#allocation2], %s265
          %268 = vsyncadd %s263, 0
          %s269 = smul.addr %s33, 4
          %s270 = scalar_lea.hbm %s0, %s269
          %s272 = sshll.u32 %s270, 4
          %s273 = int_to_ptr.hbm [resolvable:$true] %s272
          %s274 = sshll.u32 %s266, 4
          %s275 = int_to_ptr.vmem [resolvable:$true] %s274
          %277 = dma.hbm_to_vmem [thread:$0]  %s273, 64, %s275, %s263
        $region28: #{tpu_custom_call.1} parent=23 // pred_fallthru
          _
        // Predicated region
        $region29: #{tpu_custom_call.1} parent=23 // pred_check
          %p278 = pneg %p84
        $region30: #{tpu_custom_call.1} parent=23 // pred_check_branch
          %280 = sbr.rel (%p278) target = $region32
        $region31: #{tpu_custom_call.1} parent=23 // pred_region
          %s281 = sand.u32 %s26, 1
          %s282 = scalar_lea.sflag [#allocation6], %s281
          %s283 = sand.u32 %s74, 1
          %s284 = smul.addr %s283, 16
          %s285 = scalar_lea.vmem [#allocation5], %s284
          %287 = vsyncadd %s282, 0
          %s288 = smul.addr %s34, 4
          %s289 = smul.addr %s288, 4
          %s290 = scalar_lea.hbm %s1, %s289
          %s291 = sshll.u32 %s290, 4
          %s292 = int_to_ptr.hbm [resolvable:$true] %s291
          %s293 = sshll.u32 %s285, 4
          %s294 = int_to_ptr.vmem [resolvable:$true] %s293
          %299 = dma.hbm_to_vmem [thread:$0]  %s292, 256, %s294, %s282, 64, 64, 4
        $region32: #{tpu_custom_call.1} parent=23 // pred_fallthru
          _
      $region24: #{tpu_custom_call.1} parent=5 // pred_fallthru
        _
      %p300 = scmp.le.s32.totalorder 1, %s26
      %p301 = scmp.lt.s32.totalorder %s26, 9
      %p302 = pnand %p300, %p301
      %p303 = pneg %p302
      // Predicated region
      $region33: #{tpu_custom_call.1} parent=5 // pred_check
        _
      $region34: #{tpu_custom_call.1} parent=5 // pred_check_branch
        %305 = sbr.rel (%p302) target = $region36
      $region35: #{tpu_custom_call.1} parent=5 // pred_region
        %s306 = ssub.s32 %s26, 1
        %s307 = sand.u32 %s51, 1
        %s308 = scalar_lea.sflag [#allocation3], %s307
        %s309 = sand.u32 %s51, 1
        %s310 = smul.addr %s309, 4
        %s311 = scalar_lea.vmem [#allocation2], %s310
        // Predicated region
        $region37: #{tpu_custom_call.1} parent=35 // pred_check
          %p312 = pneg %p64
        $region38: #{tpu_custom_call.1} parent=35 // pred_check_branch
          %314 = sbr.rel (%p312) target = $region40
        $region39: #{tpu_custom_call.1} parent=35 // pred_region
          %316 = dma.done %s308, 64
        $region40: #{tpu_custom_call.1} parent=35 // pred_fallthru
          _
        %s317 = sand.u32 %s31, 1
        %s318 = scalar_lea.sflag [#allocation6], %s317
        %s319 = sand.u32 %s77, 1
        %s320 = smul.addr %s319, 16
        %s321 = scalar_lea.vmem [#allocation5], %s320
        // Predicated region
        $region41: #{tpu_custom_call.1} parent=35 // pred_check
          %p322 = pneg %p90
        $region42: #{tpu_custom_call.1} parent=35 // pred_check_branch
          %324 = sbr.rel (%p322) target = $region44
        $region43: #{tpu_custom_call.1} parent=35 // pred_region
          %326 = dma.done %s318, 256
        $region44: #{tpu_custom_call.1} parent=35 // pred_fallthru
          _
        // Predicated region
        $region45: #{tpu_custom_call.1} parent=35 // pred_check
          %p327 = pneg %p111
        $region46: #{tpu_custom_call.1} parent=35 // pred_check_branch
          %329 = sbr.rel (%p327) target = $region48
        $region47: #{tpu_custom_call.1} parent=35 // pred_region
          %331 = dma.done [#allocation6], 128
        $region48: #{tpu_custom_call.1} parent=35 // pred_fallthru
          _
        // Predicated region
        $region49: #{tpu_custom_call.1} parent=35 // pred_check
          %p332 = pneg %p132
        $region50: #{tpu_custom_call.1} parent=35 // pred_check_branch
          %334 = sbr.rel (%p332) target = $region52
        $region51: #{tpu_custom_call.1} parent=35 // pred_region
          %336 = dma.done [#allocation9], 128
        $region52: #{tpu_custom_call.1} parent=35 // pred_fallthru
          _
        %s337 = sand.u32 %s51, 1
        %s338 = scalar_lea.sflag [#allocation3], %s337
        %s339 = sand.u32 %s51, 1
        %s340 = smul.addr %s339, 4
        %s341 = scalar_lea.vmem [#allocation2], %s340
        %p342 = pneg %p64
        %p343 = pneg %p61
        %s344 = sand.u32 %s31, 1
        %s345 = scalar_lea.sflag [#allocation6], %s344
        %s346 = sand.u32 %s77, 1
        %s347 = smul.addr %s346, 16
        %s348 = scalar_lea.vmem [#allocation5], %s347
        %p349 = pneg %p90
        %p350 = pneg %p87
        %p351 = pneg %p111
        %p352 = pneg %p108
        %p353 = pneg %p132
        %p354 = pneg %p129
        %p355 = pneg %p160
        %p356 = pneg %p157
        %s357 = sand.u32 %s147, 1
        %s358 = scalar_lea.sflag [#allocation4], %s357
        %s359 = sand.u32 %s147, 1
        %s360 = smul.addr %s359, 4
        %s361 = scalar_lea.vmem [#allocation10], %s360
        %p362 = pneg %p188
        %p363 = pneg %p185
        %s364 = sand.u32 %s31, 1
        %s365 = scalar_lea.sflag [#allocation12], %s364
        %s366 = sand.u32 %s175, 1
        %s367 = smul.addr %s366, 4
        %s368 = scalar_lea.vmem [#allocation11], %s367
        %p369 = pneg %p216
        %p370 = pneg %p213
        %s371 = sand.u32 %s31, 1
        %s372 = scalar_lea.sflag [#allocation12], %s371
        %s373 = sand.u32 %s203, 1
        %s374 = smul.addr %s373, 4
        %s375 = scalar_lea.vmem [#allocation13], %s374
        %v377 = vld [vmem:[%s311] sm:$0xf]
        %v378 = vld [vmem:[%s321] sm:$0xf]
        %v379 = vld [vmem:[%s321 + $0x4] sm:$0xf]
        %v380 = vld [vmem:[%s321 + $0x8] sm:$0xf]
        %v381 = vld [vmem:[%s321 + $0xc] sm:$0xf]
        %v386 = vunpack.c.l.b16 %v378
        %v387 = vunpack.c.l.b16 %v379
        %v388 = vunpack.c.l.b16 %v380
        %v389 = vunpack.c.l.b16 %v381
        %v390 = vpack.c.b16 %v387, %v386
        %v391 = vpack.c.b16 %v389, %v388
        %vm394 = vcmask 261120
        %v396 = vsel %vm394, %v377, 0
        %398 = vmatpush.bf16.msra.mxu0 0
        %399 = vmatpush.bf16.msra.mxu0 0
        %400 = vmatpush.bf16.msra.mxu0 0
        %401 = vmatpush.bf16.msra.mxu0 0
        %402 = vmatpush.bf16.msra.mxu0 0
        %403 = vmatpush.bf16.msra.mxu0 0
        %404 = vmatpush.bf16.msra.mxu0 %v391
        %405 = vmatpush.bf16.msra.mxu0 %v390
        %406 = vmatmul.bf16.gmra.mxu0 %v396
        %v407 = vpop.f32.mrf.mxu0
        %v408 = vadd.f32 0.0, %v407
        %v409 = vpop.f32.mrf.mxu0
        %410 = vdwg.mxu0
        %v411 = vld [vmem:[#allocation7] sm:$0xff]
        %v412 = vld [vmem:[#allocation8] sm:$0xff]
        %v413 = vmul.f32 %v408, %v411
        %415 = vrot.lane.b32.xlu0 %v412, 24
        %v416 = vpop.permute.xlu0 %415
        %v418 = vmul.f32 %v408, %v416
        %420 = vrot.lane.b32.xlu0 %v418, 104
        %v421 = vpop.permute.xlu0 %420
        %v423 = vadd.f32 %v413, %v421
        %425 = vrot.lane.b32.xlu0 %v411, 8
        %v426 = vpop.permute.xlu0 %425
        %v428 = vmul.f32 %v408, %v426
        %429 = vrot.lane.b32.xlu0 %v412, 32
        %v430 = vpop.permute.xlu0 %429
        %v432 = vmul.f32 %v408, %v430
        %434 = vrot.lane.b32.xlu0 %v432, 104
        %v435 = vpop.permute.xlu0 %434
        %v437 = vadd.f32 %v428, %v435
        %v438 = vpack.c.bf16 %v423, %v423
        %vm439 = vcmask 60416
        %440 = vst.msk [vmem:[%s361] sm:$0xf] %vm439, %v438
        %v441 = vpack.c.bf16 %v437, %v437
        %443 = vrot.lane.b32.xlu0 %v441, 120
        %v444 = vpop.permute.xlu0 %443
        %446 = vst.msk [vmem:[%s368] sm:$0xf] %vm439, %v444
        %v447 = vpack.c.bf16 %v408, %v408
        %449 = vrot.lane.b32.xlu0 %v447, 112
        %v450 = vpop.permute.xlu0 %449
        %452 = vst.msk [vmem:[%s375] sm:$0xf] %vm439, %v450
        %s453 = sand.u32 %s147, 1
        %s454 = scalar_lea.sflag [#allocation4], %s453
        %s455 = sand.u32 %s147, 1
        %s456 = smul.addr %s455, 4
        %s457 = scalar_lea.vmem [#allocation10], %s456
        %s458 = sand.u32 %s31, 1
        %s459 = scalar_lea.sflag [#allocation12], %s458
        %s460 = sand.u32 %s175, 1
        %s461 = smul.addr %s460, 4
        %s462 = scalar_lea.vmem [#allocation11], %s461
        %s463 = sand.u32 %s31, 1
        %s464 = scalar_lea.sflag [#allocation12], %s463
        %s465 = sand.u32 %s203, 1
        %s466 = smul.addr %s465, 4
        %s467 = scalar_lea.vmem [#allocation13], %s466
        // Predicated region
        $region53: #{tpu_custom_call.1} parent=35 // pred_check
          %p468 = pneg %p157
        $region54: #{tpu_custom_call.1} parent=35 // pred_check_branch
          %470 = sbr.rel (%p468) target = $region56
        $region55: #{tpu_custom_call.1} parent=35 // pred_region
          %472 = vsyncadd %s454, 0
          %s473 = smul.addr %s35, 4
          %s474 = sadd.s32 %s36, %s473
          %s475 = smul.addr %s474, 4
          %s476 = scalar_lea.hbm %s4, %s475
          %s478 = sshll.u32 %s457, 4
          %s479 = int_to_ptr.vmem [resolvable:$true] %s478
          %s480 = sshll.u32 %s476, 4
          %s481 = int_to_ptr.hbm [resolvable:$true] %s480
          %483 = dma.vmem_to_hbm [thread:$0]  %s479, 64, %s481, %s454
        $region56: #{tpu_custom_call.1} parent=35 // pred_fallthru
          _
        // Predicated region
        $region57: #{tpu_custom_call.1} parent=35 // pred_check
          %p484 = pneg %p185
        $region58: #{tpu_custom_call.1} parent=35 // pred_check_branch
          %486 = sbr.rel (%p484) target = $region60
        $region59: #{tpu_custom_call.1} parent=35 // pred_region
          %488 = vsyncadd %s459, 0
          %s489 = smul.addr %s35, 4
          %s490 = sadd.s32 %s36, %s489
          %s491 = smul.addr %s490, 4
          %s492 = scalar_lea.hbm %s5, %s491
          %s494 = sshll.u32 %s462, 4
          %s495 = int_to_ptr.vmem [resolvable:$true] %s494
          %s496 = sshll.u32 %s492, 4
          %s497 = int_to_ptr.hbm [resolvable:$true] %s496
          %499 = dma.vmem_to_hbm [thread:$0]  %s495, 64, %s497, %s459
        $region60: #{tpu_custom_call.1} parent=35 // pred_fallthru
          _
        // Predicated region
        $region61: #{tpu_custom_call.1} parent=35 // pred_check
          %p500 = pneg %p213
        $region62: #{tpu_custom_call.1} parent=35 // pred_check_branch
          %502 = sbr.rel (%p500) target = $region64
        $region63: #{tpu_custom_call.1} parent=35 // pred_region
          %504 = vsyncadd %s464, 0
          %s505 = smul.addr %s35, 4
          %s506 = sadd.s32 %s36, %s505
          %s507 = smul.addr %s506, 4
          %s508 = scalar_lea.hbm %s6, %s507
          %s510 = sshll.u32 %s467, 4
          %s511 = int_to_ptr.vmem [resolvable:$true] %s510
          %s512 = sshll.u32 %s508, 4
          %s513 = int_to_ptr.hbm [resolvable:$true] %s512
          %515 = dma.vmem_to_hbm [thread:$0]  %s511, 64, %s513, %s464
        $region64: #{tpu_custom_call.1} parent=35 // pred_fallthru
          _
      $region36: #{tpu_custom_call.1} parent=5 // pred_fallthru
        _
      %p516 = scmp.le.s32.totalorder 2, %s26
      // Predicated region
      $region65: #{tpu_custom_call.1} parent=5 // pred_check
        %p517 = pneg %p516
      $region66: #{tpu_custom_call.1} parent=5 // pred_check_branch
        %519 = sbr.rel (%p517) target = $region68
      $region67: #{tpu_custom_call.1} parent=5 // pred_region
        %s520 = ssub.s32 %s26, 2
        // Predicated region
        $region69: #{tpu_custom_call.1} parent=67 // pred_check
          %p521 = pneg %p163
        $region70: #{tpu_custom_call.1} parent=67 // pred_check_branch
          %523 = sbr.rel (%p521) target = $region72
        $region71: #{tpu_custom_call.1} parent=67 // pred_region
          %s524 = sand.u32 %s148, 1
          %s525 = scalar_lea.sflag [#allocation4], %s524
          %s526 = sand.u32 %s148, 1
          %s527 = smul.addr %s526, 4
          %s528 = scalar_lea.vmem [#allocation10], %s527
          %530 = dma.done %s525, 64
        $region72: #{tpu_custom_call.1} parent=67 // pred_fallthru
          _
        // Predicated region
        $region73: #{tpu_custom_call.1} parent=67 // pred_check
          %p531 = pneg %p191
        $region74: #{tpu_custom_call.1} parent=67 // pred_check_branch
          %533 = sbr.rel (%p531) target = $region76
        $region75: #{tpu_custom_call.1} parent=67 // pred_region
          %s534 = sand.u32 %s32, 1
          %s535 = scalar_lea.sflag [#allocation12], %s534
          %s536 = sand.u32 %s176, 1
          %s537 = smul.addr %s536, 4
          %s538 = scalar_lea.vmem [#allocation11], %s537
          %540 = dma.done %s535, 64
        $region76: #{tpu_custom_call.1} parent=67 // pred_fallthru
          _
        // Predicated region
        $region77: #{tpu_custom_call.1} parent=67 // pred_check
          %p541 = pneg %p219
        $region78: #{tpu_custom_call.1} parent=67 // pred_check_branch
          %543 = sbr.rel (%p541) target = $region80
        $region79: #{tpu_custom_call.1} parent=67 // pred_region
          %s544 = sand.u32 %s32, 1
          %s545 = scalar_lea.sflag [#allocation12], %s544
          %s546 = sand.u32 %s204, 1
          %s547 = smul.addr %s546, 4
          %s548 = scalar_lea.vmem [#allocation13], %s547
          %550 = dma.done %s545, 64
        $region80: #{tpu_custom_call.1} parent=67 // pred_fallthru
          _
      $region68: #{tpu_custom_call.1} parent=5 // pred_fallthru
        _
    $region6: #{tpu_custom_call.1} parent=1 // loop_footer
      %s30 = sadd.s32 1, %s26
    $region7: #{tpu_custom_call.1} parent=1 // loop_footer_branch
      %25 = sbr.rel target = $region3
    $region8: #{tpu_custom_call.1} parent=1 // loop_exit
      _
    %551 = vsyncpa [#allocation3], 1
    %s552 = scalar_lea.sflag [#allocation3], 1
    %553 = vsyncpa %s552, 1
    %554 = vsyncpa [#allocation6], 1
    %s555 = scalar_lea.sflag [#allocation6], 1
    %556 = vsyncpa %s555, 1
    %557 = vsyncpa [#allocation9], 1
    %558 = vsyncpa [#allocation4], 1
    %s559 = scalar_lea.sflag [#allocation4], 1
    %560 = vsyncpa %s559, 1
    %561 = vsyncpa [#allocation12], 1
    %s562 = scalar_lea.sflag [#allocation12], 1
    %563 = vsyncpa %s562, 1

</llo_original>
